<compile_context>
chip_gen: v6e
topology: v6e:2x2x1
jax: 0.10.0
libtpu: 0.0.40
codegen_flags: <defaults>
</compile_context>

<pallas_src>
import functools

import jax
import jax.numpy as jnp
from jax.experimental import pallas as pl
from jax.experimental.pallas import tpu as pltpu

LANE = 128  # vreg lane width


def _round_up(n, m):
    return ((n + m - 1) // m) * m


def _cdiv(a, b):
    return -(-a // b)


def _default_batch_steps():
    """2 parallel batch tiles on 2-TensorCore v7x, 1 tile on single-TC v5e/v6e."""
    try:
        kind = jax.devices()[0].device_kind.lower()
    except Exception:
        return 2
    return 2 if "7" in kind else 1


def _mlp_kernel(x_ref, w1_ref, b1_ref, w2_ref, b2_ref, out_ref):
    # Hidden layer: (tb, F)bf16 @ (F, Hp)bf16 -> f32, bias add + ReLU on VPU.
    h = jnp.dot(x_ref[...], w1_ref[...], preferred_element_type=jnp.float32)
    h = jnp.maximum(h + b1_ref[...], 0.0)          # (tb, Hp) + (1, Hp) broadcast
    # Output layer: cast hidden to bf16 for the MXU, accumulate in f32.
    w2 = w2_ref[...]
    y = jnp.dot(h.astype(w2.dtype), w2, preferred_element_type=jnp.float32)
    out_ref[...] = (y + b2_ref[...]).astype(out_ref.dtype)   # logits, no activation


def pad_params(w1, b1, w2, b2, *, compute_dtype=jnp.bfloat16):
    """One-time (init-time) lane padding + bf16 cast of the weights.

    w1: (F, H), b1: (1, H), w2: (H, O), b2: (1, O).  H and O are zero-padded to
    128 lanes; F is left at its true width.  Biases stay f32.
    """
    F, H = w1.shape
    O = w2.shape[1]
    Hp = _round_up(H, LANE)
    Op = _round_up(O, LANE)
    w1p = jnp.zeros((F, Hp), compute_dtype).at[:, :H].set(w1.astype(compute_dtype))
    b1p = jnp.zeros((1, Hp), jnp.float32).at[:, :H].set(b1)
    w2p = jnp.zeros((Hp, Op), compute_dtype).at[:H, :O].set(w2.astype(compute_dtype))
    b2p = jnp.zeros((1, Op), jnp.float32).at[:, :O].set(b2)
    return w1p, b1p, w2p, b2p


def net_forward(x, w1p, b1p, w2p, b2p, *, n_out, batch_steps=1, max_tile=1024):
    """x: (B, F) f32; pre-padded params from pad_params -> (B, n_out) f32 logits."""
    B, F = x.shape
    Hp = w1p.shape[1]
    Op = w2p.shape[1]
    dtype = w1p.dtype

    # Batch tiling: `batch_steps` tiles; rows rounded to a multiple of 16
    # (bf16 sublane packing), capped so activation tiles stay small in VMEM.
    tb = min(_round_up(_cdiv(B, batch_steps), 16), max_tile)
    steps = _cdiv(B, tb)
    Bp = steps * tb

    xb = x.astype(dtype)
    if Bp != B:  # pad the batch only (feature width stays true F)
        xb = jnp.zeros((Bp, F), dtype).at[:B].set(xb)

    out_p = pl.pallas_call(
        _mlp_kernel,
        out_shape=jax.ShapeDtypeStruct((Bp, Op), jnp.float32),
        grid=(steps,),
        in_specs=[
            # Activation tile streams over the batch grid (double-buffered DMA);
            # last dim equals the full array dim, so no padded-lane DMA waste.
            pl.BlockSpec((tb, F), lambda i: (i, 0)),
            # Weights / biases: constant index_map -> VMEM-resident across the
            # grid; single-buffered since they are grid-invariant.
            pl.BlockSpec((F, Hp), lambda i: (0, 0), pipeline_mode=pl.Buffered(1)),
            pl.BlockSpec((1, Hp), lambda i: (0, 0), pipeline_mode=pl.Buffered(1)),
            pl.BlockSpec((Hp, Op), lambda i: (0, 0), pipeline_mode=pl.Buffered(1)),
            pl.BlockSpec((1, Op), lambda i: (0, 0), pipeline_mode=pl.Buffered(1)),
        ],
        out_specs=pl.BlockSpec((tb, Op), lambda i: (i, 0)),
        compiler_params=pltpu.CompilerParams(
            # Batch tiles are independent -> v7x can shard them over its 2 TCs.
            dimension_semantics=("parallel",),
        ),
    )(xb, w1p, b1p, w2p, b2p)

    # Slice back to the real (B, n_out) logits.
    return out_p[:B, :n_out]


def init_params(key, n_features, n_hidden, n_output):
    """Deterministic init mimicking torch.nn.Linear's U(-1/sqrt(fan_in), 1/sqrt(fan_in))."""
    k1, k2, k3, k4 = jax.random.split(key, 4)
    bound1 = 1.0 / jnp.sqrt(n_features)
    bound2 = 1.0 / jnp.sqrt(n_hidden)
    w1 = jax.random.uniform(k1, (n_features, n_hidden), jnp.float32, -bound1, bound1)
    b1 = jax.random.uniform(k2, (1, n_hidden), jnp.float32, -bound1, bound1)
    w2 = jax.random.uniform(k3, (n_hidden, n_output), jnp.float32, -bound2, bound2)
    b2 = jax.random.uniform(k4, (1, n_output), jnp.float32, -bound2, bound2)
    return w1, b1, w2, b2


if __name__ == "__main__":
    # Mirror the original script's data construction: two Gaussian blobs at +2 and -2,
    # n_features=2, n_hidden=10, n_output=2 (the canonical classification example).
    key = jax.random.PRNGKey(0)
    kx0, kx1, kp = jax.random.split(key, 3)

    n_per_class = 100
    n_features, n_hidden, n_output = 2, 10, 2

    x0 = 2.0 + jax.random.normal(kx0, (n_per_class, n_features), jnp.float32)
    x1 = -2.0 + jax.random.normal(kx1, (n_per_class, n_features), jnp.float32)
    x = jnp.concatenate([x0, x1], axis=0)  # (200, 2) float32

    w1, b1, w2, b2 = init_params(kp, n_features, n_hidden, n_output)

    # Pad / cast the weights ONCE at init (not per forward call).
    w1p, b1p, w2p, b2p = pad_params(w1, b1, w2, b2)

    # Jit the whole forward so the batch pad, pallas_call and output slice fuse
    # into one compiled executable; grid-step count is a static (partial) arg.
    forward = jax.jit(
        functools.partial(
            net_forward, n_out=n_output, batch_steps=_default_batch_steps()
        )
    )

    out = forward(x, w1p, b1p, w2p, b2p)
    jax.block_until_ready(out)

    # Correctness check against plain-JAX f32 reference (PyTorch forward
    # semantics).  Tolerance is loosened because x/W1/W2 are fed as bf16.
    ref = jnp.maximum(x @ w1 + b1, 0.0) @ w2 + b2
    assert out.shape == (2 * n_per_class, n_output)
    assert jnp.allclose(out, ref, atol=5e-2, rtol=5e-2)

    print("KERNEL_OK")
</pallas_src>

<mosaic_0001>
module attributes {stable_mosaic.version = 11 : i64} {
  func.func @_mlp_kernel(%arg0: i32, %arg1: memref<208x2xbf16, #tpu.memory_space<vmem>>, %arg2: memref<2x128xbf16, #tpu.memory_space<vmem>>, %arg3: memref<1x128xf32, #tpu.memory_space<vmem>>, %arg4: memref<128x128xbf16, #tpu.memory_space<vmem>>, %arg5: memref<1x128xf32, #tpu.memory_space<vmem>>, %arg6: memref<208x128xf32, #tpu.memory_space<vmem>>) attributes {dimension_semantics = [#tpu.dimension_semantics<parallel>], iteration_bounds = array<i64: 1>, scalar_prefetch = 0 : i64, scratch_operands = 0 : i64, tpu.core_type = #tpu.core_type<tc>, window_params = [{transform_indices = @transform_0, window_bounds = array<i64: 208, 2>}, {pipeline_mode = #tpu.pipeline_mode<synchronous>, transform_indices = @transform_1, window_bounds = array<i64: 2, 128>}, {pipeline_mode = #tpu.pipeline_mode<synchronous>, transform_indices = @transform_2, window_bounds = array<i64: 1, 128>}, {pipeline_mode = #tpu.pipeline_mode<synchronous>, transform_indices = @transform_3, window_bounds = array<i64: 128, 128>}, {pipeline_mode = #tpu.pipeline_mode<synchronous>, transform_indices = @transform_4, window_bounds = array<i64: 1, 128>}, {transform_indices = @transform_5, window_bounds = array<i64: 208, 128>}]} {
    %c0 = arith.constant 0 : index
    %c0_0 = arith.constant 0 : index
    %0 = vector.load %arg1[%c0, %c0_0] : memref<208x2xbf16, #tpu.memory_space<vmem>>, vector<208x2xbf16>
    %c0_1 = arith.constant 0 : index
    %c0_2 = arith.constant 0 : index
    %1 = vector.load %arg2[%c0_1, %c0_2] : memref<2x128xbf16, #tpu.memory_space<vmem>>, vector<2x128xbf16>
    %cst = arith.constant dense<0.000000e+00> : vector<208x128xf32>
    %2 = tpu.matmul %0, %1, %cst {dimension_numbers = #tpu.dot_dimension_numbers<[1], [0], [0], [1], [0, 0, 1, 1], [], []>} : vector<208x2xbf16>, vector<2x128xbf16>, vector<208x128xf32> -> vector<208x128xf32>
    %c0_3 = arith.constant 0 : index
    %c0_4 = arith.constant 0 : index
    %3 = vector.load %arg3[%c0_3, %c0_4] : memref<1x128xf32, #tpu.memory_space<vmem>>, vector<1x128xf32>
    %4 = vector.broadcast %3 : vector<1x128xf32> to vector<208x128xf32>
    %5 = arith.addf %2, %4 : vector<208x128xf32>
    %cst_5 = arith.constant 0.000000e+00 : f32
    %6 = vector.broadcast %cst_5 : f32 to vector<208x128xf32>
    %7 = arith.maximumf %5, %6 : vector<208x128xf32>
    %c0_6 = arith.constant 0 : index
    %c0_7 = arith.constant 0 : index
    %8 = vector.load %arg4[%c0_6, %c0_7] : memref<128x128xbf16, #tpu.memory_space<vmem>>, vector<128x128xbf16>
    %9 = arith.truncf %7 : vector<208x128xf32> to vector<208x128xbf16>
    %cst_8 = arith.constant dense<0.000000e+00> : vector<208x128xf32>
    %10 = tpu.matmul %9, %8, %cst_8 {dimension_numbers = #tpu.dot_dimension_numbers<[1], [0], [0], [1], [0, 0, 1, 1], [], []>} : vector<208x128xbf16>, vector<128x128xbf16>, vector<208x128xf32> -> vector<208x128xf32>
    %c0_9 = arith.constant 0 : index
    %c0_10 = arith.constant 0 : index
    %11 = vector.load %arg5[%c0_9, %c0_10] : memref<1x128xf32, #tpu.memory_space<vmem>>, vector<1x128xf32>
    %12 = vector.broadcast %11 : vector<1x128xf32> to vector<208x128xf32>
    %13 = arith.addf %10, %12 : vector<208x128xf32>
    %c0_11 = arith.constant 0 : index
    %c0_12 = arith.constant 0 : index
    %14 = vector.load %arg6[%c0_11, %c0_12] : memref<208x128xf32, #tpu.memory_space<vmem>>, vector<208x128xf32>
    tpu.vector_store %arg6[%c0_11, %c0_12], %13 {strides = array<i32>} : memref<208x128xf32, #tpu.memory_space<vmem>>, vector<208x128xf32>,
    return
  }
  func.func @transform_0(%arg0: i32) -> (i32, i32) {
    %c0_i32 = arith.constant 0 : i32
    %c0_i32_0 = arith.constant 0 : i32
    return %arg0, %c0_i32 : i32, i32
  }
  func.func @transform_1(%arg0: i32) -> (i32, i32) {
    %c0_i32 = arith.constant 0 : i32
    %c0_i32_0 = arith.constant 0 : i32
    %c0_i32_1 = arith.constant 0 : i32
    return %c0_i32, %c0_i32_0 : i32, i32
  }
  func.func @transform_2(%arg0: i32) -> (i32, i32) {
    %c0_i32 = arith.constant 0 : i32
    %c0_i32_0 = arith.constant 0 : i32
    %c0_i32_1 = arith.constant 0 : i32
    return %c0_i32, %c0_i32_0 : i32, i32
  }
  func.func @transform_3(%arg0: i32) -> (i32, i32) {
    %c0_i32 = arith.constant 0 : i32
    %c0_i32_0 = arith.constant 0 : i32
    %c0_i32_1 = arith.constant 0 : i32
    return %c0_i32, %c0_i32_0 : i32, i32
  }
  func.func @transform_4(%arg0: i32) -> (i32, i32) {
    %c0_i32 = arith.constant 0 : i32
    %c0_i32_0 = arith.constant 0 : i32
    %c0_i32_1 = arith.constant 0 : i32
    return %c0_i32, %c0_i32_0 : i32, i32
  }
  func.func @transform_5(%arg0: i32) -> (i32, i32) {
    %c0_i32 = arith.constant 0 : i32
    %c0_i32_0 = arith.constant 0 : i32
    return %arg0, %c0_i32 : i32, i32
  }
}

</mosaic_0001>

<llo_original>
// kernel: net_forward.1
$region0: #{net_forward.1}
  #allocation0 [shape = 'u32[]', space=smem, size = 0x4, offset = 0x4, fixed_abs, tag = 'smem constant byte address 0x4 - core index']
  #allocation1 [shape = 'u32[144,128]{1,0:T(1,128)}', space=vmem, size = 0x12000, scoped, tag = 'internal scratch']
  %s0 = inlined_call_operand.vmem [shape: bf16[208,2], index: 0, kind: input, shape index: {}]
  %s1 = inlined_call_operand.vmem [shape: bf16[2,128], index: 1, kind: input, shape index: {}]
  %s2 = inlined_call_operand.vmem [shape: f32[1,128], index: 2, kind: input, shape index: {}]
  %s3 = inlined_call_operand.vmem [shape: bf16[128,128], index: 3, kind: input, shape index: {}]
  %s4 = inlined_call_operand.vmem [shape: f32[1,128], index: 4, kind: input, shape index: {}]
  %s5 = inlined_call_operand.vmem [shape: f32[208,128], index: 5, kind: output, shape index: {}]
  %s6 = sld [smem:[#allocation0]]
  $region30: #{net_forward.1} parent=0
    _
  %s8 = ssub.s32 1, %s6
  %s9 = scalar_select 0, %s8, %s6
  // Predicated region
  $region2: #{net_forward.1} parent=0 // pred_check
    _
  $region3: #{net_forward.1} parent=0 // pred_check_branch
    %11 = sbr.rel (0) target = $region5
  $region4: #{net_forward.1} parent=0 // pred_region
    _
  $region5: #{net_forward.1} parent=0 // pred_fallthru
    _
  // Predicated region
  $region6: #{net_forward.1} parent=0 // pred_check
    _
  $region7: #{net_forward.1} parent=0 // pred_check_branch
    %13 = sbr.rel (0) target = $region9
  $region8: #{net_forward.1} parent=0 // pred_region
    _
  $region9: #{net_forward.1} parent=0 // pred_fallthru
    _
  // Predicated region
  $region10: #{net_forward.1} parent=0 // pred_check
    _
  $region11: #{net_forward.1} parent=0 // pred_check_branch
    %15 = sbr.rel (0) target = $region13
  $region12: #{net_forward.1} parent=0 // pred_region
    _
  $region13: #{net_forward.1} parent=0 // pred_fallthru
    _
  // Predicated region
  $region14: #{net_forward.1} parent=0 // pred_check
    _
  $region15: #{net_forward.1} parent=0 // pred_check_branch
    %17 = sbr.rel (0) target = $region17
  $region16: #{net_forward.1} parent=0 // pred_region
    _
  $region17: #{net_forward.1} parent=0 // pred_fallthru
    _
  // Predicated region
  $region18: #{net_forward.1} parent=0 // pred_check
    _
  $region19: #{net_forward.1} parent=0 // pred_check_branch
    %19 = sbr.rel (0) target = $region21
  $region20: #{net_forward.1} parent=0 // pred_region
    _
  $region21: #{net_forward.1} parent=0 // pred_fallthru
    _
  %v21 = vld [vmem:[%s0] sm:$0xf]
  %v22 = vld [vmem:[%s0 + $0x4] sm:$0xf]
  %v23 = vld [vmem:[%s0 + $0x8] sm:$0xf]
  %v24 = vld [vmem:[%s0 + $0xc] sm:$0xf]
  %v25 = vld [vmem:[%s0 + $0x10] sm:$0xf]
  %v26 = vld [vmem:[%s0 + $0x14] sm:$0xf]
  %v27 = vld [vmem:[%s0 + $0x18] sm:$0xf]
  %v28 = vld [vmem:[%s0 + $0x1c] sm:$0xf]
  %v29 = vld [vmem:[%s0 + $0x20] sm:$0xf]
  %v30 = vld [vmem:[%s0 + $0x24] sm:$0xf]
  %v31 = vld [vmem:[%s0 + $0x28] sm:$0xf]
  %v32 = vld [vmem:[%s0 + $0x2c] sm:$0xf]
  %v33 = vld [vmem:[%s0 + $0x30] sm:$0xf]
  %v34 = vld [vmem:[%s0 + $0x34] sm:$0xf]
  %v35 = vld [vmem:[%s0 + $0x38] sm:$0xf]
  %v36 = vld [vmem:[%s0 + $0x3c] sm:$0xf]
  %v37 = vld [vmem:[%s0 + $0x40] sm:$0xf]
  %v38 = vld [vmem:[%s0 + $0x44] sm:$0xf]
  %v39 = vld [vmem:[%s0 + $0x48] sm:$0xf]
  %v40 = vld [vmem:[%s0 + $0x4c] sm:$0xf]
  %v41 = vld [vmem:[%s0 + $0x50] sm:$0xf]
  %v42 = vld [vmem:[%s0 + $0x54] sm:$0xf]
  %v43 = vld [vmem:[%s0 + $0x58] sm:$0xf]
  %v44 = vld [vmem:[%s0 + $0x5c] sm:$0xf]
  %v45 = vld [vmem:[%s0 + $0x60] sm:$0xf]
  %v46 = vld [vmem:[%s0 + $0x64] sm:$0xf]
  %v47 = vld [vmem:[%s1] sm:$0x1]
  %v48 = vld [vmem:[%s2] sm:$0x1]
  %v50 = vlaneseq
  %v51 = vshrl.u32 %v50, 7
  %v52 = vsub.s32 0, %v51
  %v53 = vrot.slane %v48, %v52
  %v81 = vunpack.c.l.b16 %v21
  %v82 = vunpack.c.l.b16 %v22
  %v83 = vunpack.c.l.b16 %v23
  %v84 = vunpack.c.l.b16 %v24
  %v85 = vunpack.c.l.b16 %v25
  %v86 = vunpack.c.l.b16 %v26
  %v87 = vunpack.c.l.b16 %v27
  %v88 = vunpack.c.l.b16 %v28
  %v89 = vunpack.c.l.b16 %v29
  %v90 = vunpack.c.l.b16 %v30
  %v91 = vunpack.c.l.b16 %v31
  %v92 = vunpack.c.l.b16 %v32
  %v93 = vunpack.c.l.b16 %v33
  %v94 = vunpack.c.l.b16 %v34
  %v95 = vunpack.c.l.b16 %v35
  %v96 = vunpack.c.l.b16 %v36
  %v97 = vunpack.c.l.b16 %v37
  %v98 = vunpack.c.l.b16 %v38
  %v99 = vunpack.c.l.b16 %v39
  %v100 = vunpack.c.l.b16 %v40
  %v101 = vunpack.c.l.b16 %v41
  %v102 = vunpack.c.l.b16 %v42
  %v103 = vunpack.c.l.b16 %v43
  %v104 = vunpack.c.l.b16 %v44
  %v105 = vunpack.c.l.b16 %v45
  %v106 = vunpack.c.l.b16 %v46
  %v107 = vpack.c.b16 %v82, %v81
  %v108 = vpack.c.b16 %v84, %v83
  %v109 = vpack.c.b16 %v86, %v85
  %v110 = vpack.c.b16 %v88, %v87
  %v111 = vpack.c.b16 %v90, %v89
  %v112 = vpack.c.b16 %v92, %v91
  %v113 = vpack.c.b16 %v94, %v93
  %v114 = vpack.c.b16 %v96, %v95
  %v115 = vpack.c.b16 %v98, %v97
  %v116 = vpack.c.b16 %v100, %v99
  %v117 = vpack.c.b16 %v102, %v101
  %v118 = vpack.c.b16 %v104, %v103
  %v119 = vpack.c.b16 %v106, %v105
  %vm120 = vcmask 15360
  %v122 = vsel %vm120, %v107, 0
  %v125 = vsel %vm120, %v108, 0
  %v128 = vsel %vm120, %v109, 0
  %v131 = vsel %vm120, %v110, 0
  %v134 = vsel %vm120, %v111, 0
  %v137 = vsel %vm120, %v112, 0
  %v140 = vsel %vm120, %v113, 0
  %v143 = vsel %vm120, %v114, 0
  %v146 = vsel %vm120, %v115, 0
  %v149 = vsel %vm120, %v116, 0
  %v152 = vsel %vm120, %v117, 0
  %v155 = vsel %vm120, %v118, 0
  %v158 = vsel %vm120, %v119, 0
  %vm160 = vcmask 1040384
  %v162 = vsel %vm160, %v47, 0
  %164 = vmatprep.subr.bf16.mxu0 0
  %165 = vmatpush1.bf16.msra.mxu0 0
  %166 = vmatprep.subr.bf16.mxu0 0
  %167 = vmatpush1.bf16.msra.mxu0 0
  %168 = vmatprep.subr.bf16.mxu0 0
  %169 = vmatpush1.bf16.msra.mxu0 0
  %170 = vmatprep.subr.bf16.mxu0 0
  %171 = vmatpush1.bf16.msra.mxu0 0
  %172 = vmatprep.subr.bf16.mxu0 0
  %173 = vmatpush1.bf16.msra.mxu0 0
  %174 = vmatprep.subr.bf16.mxu0 0
  %175 = vmatpush1.bf16.msra.mxu0 0
  %176 = vmatprep.subr.bf16.mxu0 0
  %177 = vmatpush1.bf16.msra.mxu0 0
  %178 = vmatprep.subr.bf16.mxu0 0
  %179 = vmatpush1.bf16.msra.mxu0 %v162
  %180 = vmatprep.subr.bf16.mxu0 0
  %181 = vmatpush2.bf16.msra.mxu0 0
  %182 = vmatprep.subr.bf16.mxu0 0
  %183 = vmatpush2.bf16.msra.mxu0 0
  %184 = vmatprep.subr.bf16.mxu0 0
  %185 = vmatpush2.bf16.msra.mxu0 0
  %186 = vmatprep.subr.bf16.mxu0 0
  %187 = vmatpush2.bf16.msra.mxu0 0
  %188 = vmatprep.subr.bf16.mxu0 0
  %189 = vmatpush2.bf16.msra.mxu0 0
  %190 = vmatprep.subr.bf16.mxu0 0
  %191 = vmatpush2.bf16.msra.mxu0 0
  %192 = vmatprep.subr.bf16.mxu0 0
  %193 = vmatpush2.bf16.msra.mxu0 0
  %194 = vmatprep.subr.bf16.mxu0 0
  %195 = vmatpush2.bf16.msra.mxu0 0
  %196 = vmatprep.mubr.bf16.mxu0 0
  %197 = vmatmul.mubr.bf16.gmra.mxu0 %v122
  %v198 = vpop.f32.mrf.mxu0
  %v199 = vadd.f32 %v53, %v198
  %v200 = vpop.f32.mrf.mxu0
  %v201 = vpop.f32.mrf.mxu0
  %v202 = vadd.f32 %v53, %v201
  %v203 = vpop.f32.mrf.mxu0
  %204 = vmatprep.mubr.bf16.mxu0 0
  %205 = vmatmul.mubr.bf16.gmra.mxu0 %v125
  %v206 = vpop.f32.mrf.mxu0
  %v207 = vadd.f32 %v53, %v206
  %v208 = vpop.f32.mrf.mxu0
  %v209 = vpop.f32.mrf.mxu0
  %v210 = vadd.f32 %v53, %v209
  %v211 = vpop.f32.mrf.mxu0
  %212 = vmatprep.mubr.bf16.mxu0 0
  %213 = vmatmul.mubr.bf16.gmra.mxu0 %v128
  %v214 = vpop.f32.mrf.mxu0
  %v215 = vadd.f32 %v53, %v214
  %v216 = vpop.f32.mrf.mxu0
  %v217 = vpop.f32.mrf.mxu0
  %v218 = vadd.f32 %v53, %v217
  %v219 = vpop.f32.mrf.mxu0
  %220 = vmatprep.mubr.bf16.mxu0 0
  %221 = vmatmul.mubr.bf16.gmra.mxu0 %v131
  %v222 = vpop.f32.mrf.mxu0
  %v223 = vadd.f32 %v53, %v222
  %v224 = vpop.f32.mrf.mxu0
  %v225 = vpop.f32.mrf.mxu0
  %v226 = vadd.f32 %v53, %v225
  %v227 = vpop.f32.mrf.mxu0
  %228 = vmatprep.mubr.bf16.mxu0 0
  %229 = vmatmul.mubr.bf16.gmra.mxu0 %v134
  %v230 = vpop.f32.mrf.mxu0
  %v231 = vadd.f32 %v53, %v230
  %v232 = vpop.f32.mrf.mxu0
  %v233 = vpop.f32.mrf.mxu0
  %v234 = vadd.f32 %v53, %v233
  %v235 = vpop.f32.mrf.mxu0
  %236 = vmatprep.mubr.bf16.mxu0 0
  %237 = vmatmul.mubr.bf16.gmra.mxu0 %v137
  %v238 = vpop.f32.mrf.mxu0
  %v239 = vadd.f32 %v53, %v238
  %v240 = vpop.f32.mrf.mxu0
  %v241 = vpop.f32.mrf.mxu0
  %v242 = vadd.f32 %v53, %v241
  %v243 = vpop.f32.mrf.mxu0
  %244 = vmatprep.mubr.bf16.mxu0 0
  %245 = vmatmul.mubr.bf16.gmra.mxu0 %v140
  %v246 = vpop.f32.mrf.mxu0
  %v247 = vadd.f32 %v53, %v246
  %v248 = vpop.f32.mrf.mxu0
  %v249 = vpop.f32.mrf.mxu0
  %v250 = vadd.f32 %v53, %v249
  %v251 = vpop.f32.mrf.mxu0
  %252 = vmatprep.mubr.bf16.mxu0 0
  %253 = vmatmul.mubr.bf16.gmra.mxu0 %v143
  %v254 = vpop.f32.mrf.mxu0
  %v255 = vadd.f32 %v53, %v254
  %v256 = vpop.f32.mrf.mxu0
  %v257 = vpop.f32.mrf.mxu0
  %v258 = vadd.f32 %v53, %v257
  %v259 = vpop.f32.mrf.mxu0
  %260 = vmatprep.mubr.bf16.mxu0 0
  %261 = vmatmul.mubr.bf16.gmra.mxu0 %v146
  %v262 = vpop.f32.mrf.mxu0
  %v263 = vadd.f32 %v53, %v262
  %v264 = vpop.f32.mrf.mxu0
  %v265 = vpop.f32.mrf.mxu0
  %v266 = vadd.f32 %v53, %v265
  %v267 = vpop.f32.mrf.mxu0
  %268 = vmatprep.mubr.bf16.mxu0 0
  %269 = vmatmul.mubr.bf16.gmra.mxu0 %v149
  %v270 = vpop.f32.mrf.mxu0
  %v271 = vadd.f32 %v53, %v270
  %v272 = vpop.f32.mrf.mxu0
  %v273 = vpop.f32.mrf.mxu0
  %v274 = vadd.f32 %v53, %v273
  %v275 = vpop.f32.mrf.mxu0
  %276 = vmatprep.mubr.bf16.mxu0 0
  %277 = vmatmul.mubr.bf16.gmra.mxu0 %v152
  %v278 = vpop.f32.mrf.mxu0
  %v279 = vadd.f32 %v53, %v278
  %v280 = vpop.f32.mrf.mxu0
  %v281 = vpop.f32.mrf.mxu0
  %v282 = vadd.f32 %v53, %v281
  %v283 = vpop.f32.mrf.mxu0
  %284 = vmatprep.mubr.bf16.mxu0 0
  %285 = vmatmul.mubr.bf16.gmra.mxu0 %v155
  %v286 = vpop.f32.mrf.mxu0
  %v287 = vadd.f32 %v53, %v286
  %v288 = vpop.f32.mrf.mxu0
  %v289 = vpop.f32.mrf.mxu0
  %v290 = vadd.f32 %v53, %v289
  %v291 = vpop.f32.mrf.mxu0
  %292 = vmatprep.mubr.bf16.mxu0 0
  %293 = vmatmul.mubr.bf16.gmra.mxu0 %v158
  %v294 = vpop.f32.mrf.mxu0
  %v295 = vadd.f32 %v53, %v294
  %v296 = vpop.f32.mrf.mxu0
  %v297 = vpop.f32.mrf.mxu0
  %v298 = vadd.f32 %v53, %v297
  %v299 = vpop.f32.mrf.mxu0
  %300 = vdwg.mxu0
  %v301 = vmax.f32 %v199, 0.0
  %v302 = vmax.f32 %v202, 0.0
  %v303 = vmax.f32 %v207, 0.0
  %v304 = vmax.f32 %v210, 0.0
  %v305 = vmax.f32 %v215, 0.0
  %v306 = vmax.f32 %v218, 0.0
  %v307 = vmax.f32 %v223, 0.0
  %v308 = vmax.f32 %v226, 0.0
  %v309 = vmax.f32 %v231, 0.0
  %v310 = vmax.f32 %v234, 0.0
  %v311 = vmax.f32 %v239, 0.0
  %v312 = vmax.f32 %v242, 0.0
  %v313 = vmax.f32 %v247, 0.0
  %v314 = vmax.f32 %v250, 0.0
  %v315 = vmax.f32 %v255, 0.0
  %v316 = vmax.f32 %v258, 0.0
  %v317 = vmax.f32 %v263, 0.0
  %v318 = vmax.f32 %v266, 0.0
  %v319 = vmax.f32 %v271, 0.0
  %v320 = vmax.f32 %v274, 0.0
  %v321 = vmax.f32 %v279, 0.0
  %v322 = vmax.f32 %v282, 0.0
  %v323 = vmax.f32 %v287, 0.0
  %v324 = vmax.f32 %v290, 0.0
  %v325 = vmax.f32 %v295, 0.0
  %v326 = vmax.f32 %v298, 0.0
  %v327 = vld [vmem:[%s3] sm:$0xf]
  %v328 = vld [vmem:[%s3 + $0x4] sm:$0xf]
  %v329 = vld [vmem:[%s3 + $0x8] sm:$0xf]
  %v330 = vld [vmem:[%s3 + $0xc] sm:$0xf]
  %v331 = vld [vmem:[%s3 + $0x10] sm:$0xf]
  %v332 = vld [vmem:[%s3 + $0x14] sm:$0xf]
  %v333 = vld [vmem:[%s3 + $0x18] sm:$0xf]
  %v334 = vld [vmem:[%s3 + $0x1c] sm:$0xf]
  %v335 = vld [vmem:[%s3 + $0x20] sm:$0xf]
  %v336 = vld [vmem:[%s3 + $0x24] sm:$0xf]
  %v337 = vld [vmem:[%s3 + $0x28] sm:$0xf]
  %v338 = vld [vmem:[%s3 + $0x2c] sm:$0xf]
  %v339 = vld [vmem:[%s3 + $0x30] sm:$0xf]
  %v340 = vld [vmem:[%s3 + $0x34] sm:$0xf]
  %v341 = vld [vmem:[%s3 + $0x38] sm:$0xf]
  %v342 = vld [vmem:[%s3 + $0x3c] sm:$0xf]
  %v343 = vpack.c.bf16 %v302, %v301
  %v344 = vpack.c.bf16 %v304, %v303
  %v345 = vpack.c.bf16 %v306, %v305
  %v346 = vpack.c.bf16 %v308, %v307
  %v347 = vpack.c.bf16 %v310, %v309
  %v348 = vpack.c.bf16 %v312, %v311
  %v349 = vpack.c.bf16 %v314, %v313
  %v350 = vpack.c.bf16 %v316, %v315
  %v351 = vpack.c.bf16 %v318, %v317
  %v352 = vpack.c.bf16 %v320, %v319
  %v353 = vpack.c.bf16 %v322, %v321
  %v354 = vpack.c.bf16 %v324, %v323
  %v355 = vpack.c.bf16 %v326, %v325
  %v356 = vld [vmem:[%s4] sm:$0x1]
  %v358 = vlaneseq
  %v359 = vshrl.u32 %v358, 7
  %v360 = vsub.s32 0, %v359
  %v361 = vrot.slane %v356, %v360
  %v379 = vunpack.c.l.b16 %v327
  %v380 = vunpack.c.l.b16 %v328
  %v381 = vunpack.c.l.b16 %v329
  %v382 = vunpack.c.l.b16 %v330
  %v383 = vunpack.c.l.b16 %v331
  %v384 = vunpack.c.l.b16 %v332
  %v385 = vunpack.c.l.b16 %v333
  %v386 = vunpack.c.l.b16 %v334
  %v387 = vunpack.c.l.b16 %v335
  %v388 = vunpack.c.l.b16 %v336
  %v389 = vunpack.c.l.b16 %v337
  %v390 = vunpack.c.l.b16 %v338
  %v391 = vunpack.c.l.b16 %v339
  %v392 = vunpack.c.l.b16 %v340
  %v393 = vunpack.c.l.b16 %v341
  %v394 = vunpack.c.l.b16 %v342
  %v395 = vpack.c.b16 %v380, %v379
  %v396 = vpack.c.b16 %v382, %v381
  %v397 = vpack.c.b16 %v384, %v383
  %v398 = vpack.c.b16 %v386, %v385
  %v399 = vpack.c.b16 %v388, %v387
  %v400 = vpack.c.b16 %v390, %v389
  %v401 = vpack.c.b16 %v392, %v391
  %v402 = vpack.c.b16 %v394, %v393
  %411 = vmatprep.subr.bf16.mxu0 0
  %412 = vmatpush1.bf16.msra.mxu0 %v402
  %413 = vmatprep.subr.bf16.mxu0 0
  %414 = vmatpush1.bf16.msra.mxu0 %v401
  %415 = vmatprep.subr.bf16.mxu0 0
  %416 = vmatpush1.bf16.msra.mxu0 %v400
  %417 = vmatprep.subr.bf16.mxu0 0
  %418 = vmatpush1.bf16.msra.mxu0 %v399
  %419 = vmatprep.subr.bf16.mxu0 0
  %420 = vmatpush1.bf16.msra.mxu0 %v398
  %421 = vmatprep.subr.bf16.mxu0 0
  %422 = vmatpush1.bf16.msra.mxu0 %v397
  %423 = vmatprep.subr.bf16.mxu0 0
  %424 = vmatpush1.bf16.msra.mxu0 %v396
  %425 = vmatprep.subr.bf16.mxu0 0
  %426 = vmatpush1.bf16.msra.mxu0 %v395
  %427 = vmatprep.subr.bf16.mxu0 0
  %428 = vmatpush2.bf16.msra.mxu0 0
  %429 = vmatprep.subr.bf16.mxu0 0
  %430 = vmatpush2.bf16.msra.mxu0 0
  %431 = vmatprep.subr.bf16.mxu0 0
  %432 = vmatpush2.bf16.msra.mxu0 0
  %433 = vmatprep.subr.bf16.mxu0 0
  %434 = vmatpush2.bf16.msra.mxu0 0
  %435 = vmatprep.subr.bf16.mxu0 0
  %436 = vmatpush2.bf16.msra.mxu0 0
  %437 = vmatprep.subr.bf16.mxu0 0
  %438 = vmatpush2.bf16.msra.mxu0 0
  %439 = vmatprep.subr.bf16.mxu0 0
  %440 = vmatpush2.bf16.msra.mxu0 0
  %441 = vmatprep.subr.bf16.mxu0 0
  %442 = vmatpush2.bf16.msra.mxu0 0
  %443 = vmatprep.mubr.bf16.mxu0 0
  %444 = vmatmul.mubr.bf16.gmra.mxu0 %v343
  %v445 = vpop.f32.mrf.mxu0
  %v446 = vadd.f32 %v361, %v445
  %v447 = vpop.f32.mrf.mxu0
  %v448 = vpop.f32.mrf.mxu0
  %v449 = vadd.f32 %v361, %v448
  %v450 = vpop.f32.mrf.mxu0
  %451 = vmatprep.mubr.bf16.mxu0 0
  %452 = vmatmul.mubr.bf16.gmra.mxu0 %v344
  %v453 = vpop.f32.mrf.mxu0
  %v454 = vadd.f32 %v361, %v453
  %v455 = vpop.f32.mrf.mxu0
  %v456 = vpop.f32.mrf.mxu0
  %v457 = vadd.f32 %v361, %v456
  %v458 = vpop.f32.mrf.mxu0
  %459 = vmatprep.mubr.bf16.mxu0 0
  %460 = vmatmul.mubr.bf16.gmra.mxu0 %v345
  %v461 = vpop.f32.mrf.mxu0
  %v462 = vadd.f32 %v361, %v461
  %v463 = vpop.f32.mrf.mxu0
  %v464 = vpop.f32.mrf.mxu0
  %v465 = vadd.f32 %v361, %v464
  %v466 = vpop.f32.mrf.mxu0
  %467 = vmatprep.mubr.bf16.mxu0 0
  %468 = vmatmul.mubr.bf16.gmra.mxu0 %v346
  %v469 = vpop.f32.mrf.mxu0
  %v470 = vadd.f32 %v361, %v469
  %v471 = vpop.f32.mrf.mxu0
  %v472 = vpop.f32.mrf.mxu0
  %v473 = vadd.f32 %v361, %v472
  %v474 = vpop.f32.mrf.mxu0
  %475 = vmatprep.mubr.bf16.mxu0 0
  %476 = vmatmul.mubr.bf16.gmra.mxu0 %v347
  %v477 = vpop.f32.mrf.mxu0
  %v478 = vadd.f32 %v361, %v477
  %v479 = vpop.f32.mrf.mxu0
  %v480 = vpop.f32.mrf.mxu0
  %v481 = vadd.f32 %v361, %v480
  %v482 = vpop.f32.mrf.mxu0
  %483 = vmatprep.mubr.bf16.mxu0 0
  %484 = vmatmul.mubr.bf16.gmra.mxu0 %v348
  %v485 = vpop.f32.mrf.mxu0
  %v486 = vadd.f32 %v361, %v485
  %v487 = vpop.f32.mrf.mxu0
  %v488 = vpop.f32.mrf.mxu0
  %v489 = vadd.f32 %v361, %v488
  %v490 = vpop.f32.mrf.mxu0
  %491 = vmatprep.mubr.bf16.mxu0 0
  %492 = vmatmul.mubr.bf16.gmra.mxu0 %v349
  %v493 = vpop.f32.mrf.mxu0
  %v494 = vadd.f32 %v361, %v493
  %v495 = vpop.f32.mrf.mxu0
  %v496 = vpop.f32.mrf.mxu0
  %v497 = vadd.f32 %v361, %v496
  %v498 = vpop.f32.mrf.mxu0
  %499 = vmatprep.mubr.bf16.mxu0 0
  %500 = vmatmul.mubr.bf16.gmra.mxu0 %v350
  %v501 = vpop.f32.mrf.mxu0
  %v502 = vadd.f32 %v361, %v501
  %v503 = vpop.f32.mrf.mxu0
  %v504 = vpop.f32.mrf.mxu0
  %v505 = vadd.f32 %v361, %v504
  %v506 = vpop.f32.mrf.mxu0
  %507 = vmatprep.mubr.bf16.mxu0 0
  %508 = vmatmul.mubr.bf16.gmra.mxu0 %v351
  %v509 = vpop.f32.mrf.mxu0
  %v510 = vadd.f32 %v361, %v509
  %v511 = vpop.f32.mrf.mxu0
  %v512 = vpop.f32.mrf.mxu0
  %v513 = vadd.f32 %v361, %v512
  %v514 = vpop.f32.mrf.mxu0
  %515 = vmatprep.mubr.bf16.mxu0 0
  %516 = vmatmul.mubr.bf16.gmra.mxu0 %v352
  %v517 = vpop.f32.mrf.mxu0
  %v518 = vadd.f32 %v361, %v517
  %v519 = vpop.f32.mrf.mxu0
  %v520 = vpop.f32.mrf.mxu0
  %v521 = vadd.f32 %v361, %v520
  %v522 = vpop.f32.mrf.mxu0
  %523 = vmatprep.mubr.bf16.mxu0 0
  %524 = vmatmul.mubr.bf16.gmra.mxu0 %v353
  %v525 = vpop.f32.mrf.mxu0
  %v526 = vadd.f32 %v361, %v525
  %v527 = vpop.f32.mrf.mxu0
  %v528 = vpop.f32.mrf.mxu0
  %v529 = vadd.f32 %v361, %v528
  %v530 = vpop.f32.mrf.mxu0
  %531 = vmatprep.mubr.bf16.mxu0 0
  %532 = vmatmul.mubr.bf16.gmra.mxu0 %v354
  %v533 = vpop.f32.mrf.mxu0
  %v534 = vadd.f32 %v361, %v533
  %v535 = vpop.f32.mrf.mxu0
  %v536 = vpop.f32.mrf.mxu0
  %v537 = vadd.f32 %v361, %v536
  %v538 = vpop.f32.mrf.mxu0
  %539 = vmatprep.mubr.bf16.mxu0 0
  %540 = vmatmul.mubr.bf16.gmra.mxu0 %v355
  %v541 = vpop.f32.mrf.mxu0
  %v542 = vadd.f32 %v361, %v541
  %v543 = vpop.f32.mrf.mxu0
  %v544 = vpop.f32.mrf.mxu0
  %v545 = vadd.f32 %v361, %v544
  %v546 = vpop.f32.mrf.mxu0
  %547 = vdwg.mxu0
  %548 = vst [vmem:[%s5] sm:$0xff] %v446
  %549 = vst [vmem:[%s5 + $0x8] sm:$0xff] %v449
  %550 = vst [vmem:[%s5 + $0x10] sm:$0xff] %v454
  %551 = vst [vmem:[%s5 + $0x18] sm:$0xff] %v457
  %552 = vst [vmem:[%s5 + $0x20] sm:$0xff] %v462
  %553 = vst [vmem:[%s5 + $0x28] sm:$0xff] %v465
  %554 = vst [vmem:[%s5 + $0x30] sm:$0xff] %v470
  %555 = vst [vmem:[%s5 + $0x38] sm:$0xff] %v473
  %556 = vst [vmem:[%s5 + $0x40] sm:$0xff] %v478
  %557 = vst [vmem:[%s5 + $0x48] sm:$0xff] %v481
  %558 = vst [vmem:[%s5 + $0x50] sm:$0xff] %v486
  %559 = vst [vmem:[%s5 + $0x58] sm:$0xff] %v489
  %560 = vst [vmem:[%s5 + $0x60] sm:$0xff] %v494
  %561 = vst [vmem:[%s5 + $0x68] sm:$0xff] %v497
  %562 = vst [vmem:[%s5 + $0x70] sm:$0xff] %v502
  %563 = vst [vmem:[%s5 + $0x78] sm:$0xff] %v505
  %564 = vst [vmem:[%s5 + $0x80] sm:$0xff] %v510
  %565 = vst [vmem:[%s5 + $0x88] sm:$0xff] %v513
  %566 = vst [vmem:[%s5 + $0x90] sm:$0xff] %v518
  %567 = vst [vmem:[%s5 + $0x98] sm:$0xff] %v521
  %568 = vst [vmem:[%s5 + $0xa0] sm:$0xff] %v526
  %569 = vst [vmem:[%s5 + $0xa8] sm:$0xff] %v529
  %570 = vst [vmem:[%s5 + $0xb0] sm:$0xff] %v534
  %571 = vst [vmem:[%s5 + $0xb8] sm:$0xff] %v537
  %572 = vst [vmem:[%s5 + $0xc0] sm:$0xff] %v542
  %573 = vst [vmem:[%s5 + $0xc8] sm:$0xff] %v545
  // Predicated region
  $region22: #{net_forward.1} parent=0 // pred_check
    _
  $region23: #{net_forward.1} parent=0 // pred_check_branch
    %575 = sbr.rel (0) target = $region25
  $region24: #{net_forward.1} parent=0 // pred_region
    _
  $region25: #{net_forward.1} parent=0 // pred_fallthru
    _
  // Predicated region
  $region26: #{net_forward.1} parent=0 // pred_check
    _
  $region27: #{net_forward.1} parent=0 // pred_check_branch
    %577 = sbr.rel (0) target = $region29
  $region28: #{net_forward.1} parent=0 // pred_region
    _
  $region29: #{net_forward.1} parent=0 // pred_fallthru
    _

</llo_original>
